<compile_context>
chip_gen: v7x
topology: tpu7x:2x2x1
jax: 0.10.0
libtpu: 0.0.40
codegen_flags: <defaults>
</compile_context>

<pallas_src>
import jax
import jax.numpy as jnp
from jax.experimental import pallas as pl
from jax.experimental.pallas import tpu as pltpu


HIDDENS = (256, 128)
LANE = 128

# Graceful degradation if pipeline_mode / Buffered is unavailable.
_PARAM_PIPELINE = {"pipeline_mode": pl.Buffered(1)} if hasattr(pl, "Buffered") else {}


def _round_up(x, m):
    return (x + m - 1) // m * m


def _vmem_capacity_bytes():
    try:
        info = pltpu.get_tpu_info()
        cap = getattr(info, "vmem_capacity_bytes", None)
        if cap:
            return int(cap)
    except Exception:
        pass
    return 64 << 20  # conservative (v7x per-TC)


def _pick_tn(out_dim_pad, tn_req):
    """Largest multiple of 128 that divides out_dim_pad and is <= tn_req."""
    m = out_dim_pad // LANE
    best = LANE
    for d in range(1, m + 1):
        t = d * LANE
        if m % d == 0 and t <= tn_req:
            best = t
    return best


# ----------------------------------------------------------------------------
# Kernel bodies
# ----------------------------------------------------------------------------
def _mlp_math(xb, w1, b1, w2, b2, w3, b3, s3, t3):
    """Decoder math with BN1/BN2 pre-folded into (w2,b2)/(w3,b3).

    bf16 matmul operands, f32 MXU accumulation; bias / ReLU / BN3 affine in f32.
    """
    h = jnp.dot(xb, w1[...], preferred_element_type=jnp.float32) + b1[...]
    h = jnp.maximum(h, 0.0).astype(jnp.bfloat16)
    h = jnp.dot(h, w2[...], preferred_element_type=jnp.float32) + b2[...]
    h = jnp.maximum(h, 0.0).astype(jnp.bfloat16)
    h = jnp.dot(h, w3[...], preferred_element_type=jnp.float32) + b3[...]
    return jnp.maximum(h, 0.0) * s3[...] + t3[...]


def _make_decoder_kernel(out_dim):
    """Decoder.forward / forward_from_repr: (tm, repr) -> (tm, out_dim)."""
    def kernel(x_ref, w1_ref, b1_ref, w2_ref, b2_ref,
               w3_ref, b3_ref, s3_ref, t3_ref, out_ref):
        h = _mlp_math(x_ref[...], w1_ref, b1_ref, w2_ref, b2_ref,
                      w3_ref, b3_ref, s3_ref, t3_ref)
        # Padded (lane-aligned) columns are dropped here: no padded HBM writeback.
        out_ref[...] = h[:, :out_dim].astype(out_ref.dtype)
    return kernel


def _make_fused_kernel(out_dim):
    """MaskedReconstruction.forward: encoder embedding fused as a 4th matmul."""
    def kernel(x_ref, wenc_ref, w1_ref, b1_ref, w2_ref, b2_ref,
               w3_ref, b3_ref, s3_ref, t3_ref, out_ref):
        r = jnp.dot(x_ref[...], wenc_ref[...],
                    preferred_element_type=jnp.float32).astype(jnp.bfloat16)
        h = _mlp_math(r, w1_ref, b1_ref, w2_ref, b2_ref,
                      w3_ref, b3_ref, s3_ref, t3_ref)
        out_ref[...] = h[:, :out_dim].astype(out_ref.dtype)
    return kernel


def _make_decoder_kernel_nt():
    """N-tiled layer-3 path: layers 1-2 computed once per batch tile (j==0)."""
    def kernel(x_ref, w1_ref, b1_ref, w2_ref, b2_ref,
               w3_ref, b3_ref, s3_ref, t3_ref, out_ref, h2_ref):
        @pl.when(pl.program_id(1) == 0)
        def _():
            h = jnp.dot(x_ref[...], w1_ref[...],
                        preferred_element_type=jnp.float32) + b1_ref[...]
            h = jnp.maximum(h, 0.0).astype(jnp.bfloat16)
            h = jnp.dot(h, w2_ref[...],
                        preferred_element_type=jnp.float32) + b2_ref[...]
            h2_ref[...] = jnp.maximum(h, 0.0).astype(h2_ref.dtype)
        h3 = jnp.dot(h2_ref[...], w3_ref[...],
                     preferred_element_type=jnp.float32) + b3_ref[...]
        out_ref[...] = (jnp.maximum(h3, 0.0) * s3_ref[...]
                        + t3_ref[...]).astype(out_ref.dtype)
    return kernel


def _make_fused_kernel_nt():
    def kernel(x_ref, wenc_ref, w1_ref, b1_ref, w2_ref, b2_ref,
               w3_ref, b3_ref, s3_ref, t3_ref, out_ref, h2_ref):
        @pl.when(pl.program_id(1) == 0)
        def _():
            r = jnp.dot(x_ref[...], wenc_ref[...],
                        preferred_element_type=jnp.float32).astype(jnp.bfloat16)
            h = jnp.dot(r, w1_ref[...],
                        preferred_element_type=jnp.float32) + b1_ref[...]
            h = jnp.maximum(h, 0.0).astype(jnp.bfloat16)
            h = jnp.dot(h, w2_ref[...],
                        preferred_element_type=jnp.float32) + b2_ref[...]
            h2_ref[...] = jnp.maximum(h, 0.0).astype(h2_ref.dtype)
        h3 = jnp.dot(h2_ref[...], w3_ref[...],
                     preferred_element_type=jnp.float32) + b3_ref[...]
        out_ref[...] = (jnp.maximum(h3, 0.0) * s3_ref[...]
                        + t3_ref[...]).astype(out_ref.dtype)
    return kernel


# ----------------------------------------------------------------------------
# pallas_call wrapper
# ----------------------------------------------------------------------------
def _run_mlp(x2d, prep, *, fused, out_dtype, tm_target, tn, core_parallel):
    """Run the decoder MLP over a batch-tiled grid.

    x2d:  (B, K) activations (cast to bf16 here; streamed per batch tile).
    prep: prepared params (bf16 matmul weights, f32 bias/affine, layer-3 padded).
    Returns a (B, out_dim) array of dtype `out_dtype`.
    """
    B, K = x2d.shape
    out_dim, out_dim_pad = prep["out_dim"], prep["out_dim_pad"]
    x2d = x2d.astype(jnp.bfloat16)

    params = ((prep["wenc"],) if fused else ()) + (
        prep["w1"], prep["b1"], prep["w2"], prep["b2"],
        prep["w3"], prep["b3"], prep["s3"], prep["t3"])

    # Layer-3 output (N) tiling decision.
    tn_req = (out_dim_pad if out_dim_pad <= 4096 else 2048) if tn is None \
        else max(LANE, int(tn))
    tn = _pick_tn(out_dim_pad, tn_req)
    n_tiled = tn < out_dim_pad

    out_isz = jnp.dtype(out_dtype).itemsize

    def _bytes(a):
        return int(a.size) * a.dtype.itemsize

    const_params = params if not n_tiled else params[:-4]
    const_bytes = sum(_bytes(a) for a in const_params)            # Buffered(1): x1
    tiled_bytes = 0 if not n_tiled else 2 * (HIDDENS[1] * tn * 2 + 3 * tn * 4)
    out_w = out_dim if not n_tiled else tn

    def footprint(tm):
        f = 2 * tm * K * 2                      # x tile (bf16), double-buffered
        f += 2 * tm * out_w * out_isz           # out tile, double-buffered
        f += const_bytes + tiled_bytes          # resident / double-buffered params
        inter = HIDDENS[0] + HIDDENS[1] + (out_dim_pad if not n_tiled else tn)
        f += tm * inter * 6                     # f32 intermediates + bf16 recasts
        if n_tiled:
            f += tm * HIDDENS[1] * 2            # h2 scratch (bf16)
        return f

    cap = _vmem_capacity_bytes()
    budget = int(min(cap, 128 << 20)) * 3 // 4
    tm_t = max(16, _round_up(int(tm_target), 16))
    while tm_t > 16 and footprint(tm_t) > budget:
        tm_t //= 2
    tm_t = max(16, _round_up(tm_t, 16))

    # Size tm so the last batch tile has minimal slack (avoid ~2x batch padding);
    # multiple of 16 keeps bf16 vregs fully packed.
    n_bt = max(1, -(-B // tm_t))
    tm = max(16, _round_up(-(-B // n_bt), 16))
    b_pad = _round_up(B, tm)
    if b_pad != B:
        x2d = jnp.pad(x2d, ((0, b_pad - B), (0, 0)))

    vmem_limit = int(min(max(footprint(tm) * 5 // 4 + (4 << 20), 16 << 20),
                         cap * 9 // 10))

    repr_size = prep["w1"].shape[0]
    flops = 2 * b_pad * (repr_size * HIDDENS[0] + HIDDENS[0] * HIDDENS[1]
                         + HIDDENS[1] * out_dim_pad)
    if fused:
        flops += 2 * b_pad * K * repr_size
    bytes_accessed = (b_pad * K * 2 + sum(_bytes(a) for a in params)
                      + b_pad * (out_dim if not n_tiled else out_dim_pad) * out_isz)
    cost = pl.CostEstimate(flops=int(flops), transcendentals=0,
                           bytes_accessed=int(bytes_accessed))

    # On v7x, mark the batch axis core-parallel to use both TensorCores.
    batch_sem = pltpu.CORE_PARALLEL if core_parallel else "parallel"

    if not n_tiled:
        kernel = _make_fused_kernel(out_dim) if fused else _make_decoder_kernel(out_dim)
        in_specs = ([pl.BlockSpec((tm, K), lambda i: (i, 0))]
                    + [pl.BlockSpec(a.shape, lambda i: (0, 0), **_PARAM_PIPELINE)
                       for a in params])
        out = pl.pallas_call(
            kernel,
            out_shape=jax.ShapeDtypeStruct((b_pad, out_dim), out_dtype),
            grid=(b_pad // tm,),
            in_specs=in_specs,
            out_specs=pl.BlockSpec((tm, out_dim), lambda i: (i, 0)),
            compiler_params=pltpu.CompilerParams(
                dimension_semantics=(batch_sem,),
                vmem_limit_bytes=vmem_limit),
            cost_estimate=cost,
        )(x2d, *params)
        return out[:B, :]

    # N-tiled layer-3 path (large out_dim): grid = (batch tiles, N tiles).
    kernel = _make_fused_kernel_nt() if fused else _make_decoder_kernel_nt()
    const = params[:-4]
    in_specs = ([pl.BlockSpec((tm, K), lambda i, j: (i, 0))]
                + [pl.BlockSpec(a.shape, lambda i, j: (0, 0), **_PARAM_PIPELINE)
                   for a in const]
                + [pl.BlockSpec((HIDDENS[1], tn), lambda i, j: (0, j)),
                   pl.BlockSpec((1, tn), lambda i, j: (0, j)),
                   pl.BlockSpec((1, tn), lambda i, j: (0, j)),
                   pl.BlockSpec((1, tn), lambda i, j: (0, j))])
    out = pl.pallas_call(
        kernel,
        out_shape=jax.ShapeDtypeStruct((b_pad, out_dim_pad), out_dtype),
        grid=(b_pad // tm, out_dim_pad // tn),
        in_specs=in_specs,
        out_specs=pl.BlockSpec((tm, tn), lambda i, j: (i, j)),
        scratch_shapes=[pltpu.VMEM((tm, HIDDENS[1]), jnp.bfloat16)],
        compiler_params=pltpu.CompilerParams(
            dimension_semantics=(batch_sem, "arbitrary"),
            vmem_limit_bytes=vmem_limit),
        cost_estimate=cost,
    )(x2d, *params)
    return out[:B, :out_dim]


# ----------------------------------------------------------------------------
# Public forward functions
# ----------------------------------------------------------------------------
def decoder_forward(x_repr, prep, *, window_size, in_size,
                    out_dtype=jnp.bfloat16, tm_target=512, tn=None,
                    core_parallel=False):
    """Decoder.forward / MaskedReconstruction.forward_from_repr."""
    B = x_repr.shape[0]
    out2d = _run_mlp(x_repr, prep, fused=False, out_dtype=out_dtype,
                     tm_target=tm_target, tn=tn, core_parallel=core_parallel)
    return out2d.reshape(B, window_size, in_size)


def masked_reconstruction_forward(x, prep, *, window_size, in_size,
                                  out_dtype=jnp.bfloat16, tm_target=512, tn=None,
                                  core_parallel=False):
    """MaskedReconstruction.forward: encoder embedding + decoder, one kernel.

    TODO(synk): the real encoder (`encoder.get_embedding`) is an abstract external
    module; a deterministic linear embedding over the flattened window is
    substituted and fused into the decoder kernel as an extra MXU layer.
    """
    B = x.shape[0]
    x_flat = x.reshape(B, window_size * in_size)
    out2d = _run_mlp(x_flat, prep, fused=True, out_dtype=out_dtype,
                     tm_target=tm_target, tn=tn, core_parallel=core_parallel)
    return out2d.reshape(B, window_size, in_size)


# ----------------------------------------------------------------------------
# Parameter construction & one-time preparation
# ----------------------------------------------------------------------------
def _linear_init(key, fan_in, fan_out):
    kw, kb = jax.random.split(key)
    bound = 1.0 / jnp.sqrt(jnp.float32(fan_in))
    w = jax.random.uniform(kw, (fan_in, fan_out), jnp.float32, -bound, bound)
    b = jax.random.uniform(kb, (1, fan_out), jnp.float32, -bound, bound)
    return w, b


def _bn_fold(key, num_features):
    # BatchNorm1d eval-mode params folded into per-feature scale/shift.
    kg, kb, km, kv = jax.random.split(key, 4)
    gamma = 1.0 + 0.1 * jax.random.normal(kg, (1, num_features), jnp.float32)
    beta = 0.1 * jax.random.normal(kb, (1, num_features), jnp.float32)
    mean = 0.1 * jax.random.normal(km, (1, num_features), jnp.float32)
    var = 1.0 + 0.1 * jax.random.uniform(kv, (1, num_features), jnp.float32)
    scale = gamma * jax.lax.rsqrt(var + 1e-5)
    shift = beta - mean * scale
    return scale, shift


def make_decoder_params(key, repr_size, in_size, window_size):
    """PyTorch-form (f32, unfolded) decoder params; also used by the reference."""
    out_dim = in_size * window_size
    keys = jax.random.split(key, 6)
    w1, b1 = _linear_init(keys[0], repr_size, HIDDENS[0])
    s1, t1 = _bn_fold(keys[1], HIDDENS[0])
    w2, b2 = _linear_init(keys[2], HIDDENS[0], HIDDENS[1])
    s2, t2 = _bn_fold(keys[3], HIDDENS[1])
    w3, b3 = _linear_init(keys[4], HIDDENS[1], out_dim)
    s3, t3 = _bn_fold(keys[5], out_dim)
    return dict(w1=w1, b1=b1, s1=s1, t1=t1, w2=w2, b2=b2, s2=s2, t2=t2,
                w3=w3, b3=b3, s3=s3, t3=t3)


def prepare_params(raw, *, out_dim, enc_w=None):
    """One-time prep: fold BN1/BN2 into next-layer weights, lane-pad layer 3,
    cast matmul weights to bf16. Done once at build time, not per forward call."""
    w2 = raw["s1"].reshape(-1, 1) * raw["w2"]
    b2 = raw["b2"] + raw["t1"] @ raw["w2"]
    w3 = raw["s2"].reshape(-1, 1) * raw["w3"]
    b3 = raw["b3"] + raw["t2"] @ raw["w3"]
    s3, t3 = raw["s3"], raw["t3"]
    out_dim_pad = _round_up(out_dim, LANE)
    pad = out_dim_pad - out_dim
    if pad:
        w3 = jnp.pad(w3, ((0, 0), (0, pad)))
        b3 = jnp.pad(b3, ((0, 0), (0, pad)))
        s3 = jnp.pad(s3, ((0, 0), (0, pad)))
        t3 = jnp.pad(t3, ((0, 0), (0, pad)))
    prep = dict(
        w1=raw["w1"].astype(jnp.bfloat16), b1=raw["b1"],
        w2=w2.astype(jnp.bfloat16), b2=b2,
        w3=w3.astype(jnp.bfloat16), b3=b3, s3=s3, t3=t3,
        out_dim=out_dim, out_dim_pad=out_dim_pad)
    if enc_w is not None:
        prep["wenc"] = enc_w.astype(jnp.bfloat16)
    return prep


# ----------------------------------------------------------------------------
# Pure-JAX reference (f32 math, eval-mode semantics, unfolded params)
# ----------------------------------------------------------------------------
def decoder_reference(x_repr, p, *, window_size, in_size):
    h = jnp.maximum(x_repr @ p["w1"] + p["b1"], 0.0) * p["s1"] + p["t1"]
    h = jnp.maximum(h @ p["w2"] + p["b2"], 0.0) * p["s2"] + p["t2"]
    h = jnp.maximum(h @ p["w3"] + p["b3"], 0.0) * p["s3"] + p["t3"]
    return h.reshape(x_repr.shape[0], window_size, in_size)


if __name__ == "__main__":
    key = jax.random.PRNGKey(0)
    k_x, k_enc, k_dec, k_x2, k_enc2, k_dec2 = jax.random.split(key, 6)

    # --- Case 1: small module shapes (single output tile path).
    batch, window_size, in_size, repr_size = 4, 8, 4, 32
    x = jax.random.normal(k_x, (batch, window_size, in_size), jnp.float32)
    enc_w = 0.1 * jax.random.normal(k_enc, (window_size * in_size, repr_size),
                                    jnp.float32)
    raw = make_decoder_params(k_dec, repr_size, in_size, window_size)
    prep = prepare_params(raw, out_dim=in_size * window_size, enc_w=enc_w)

    out = masked_reconstruction_forward(x, prep, window_size=window_size,
                                        in_size=in_size)
    out = jax.block_until_ready(out)

    x_repr = x.reshape(batch, -1) @ enc_w
    out_dec = jax.block_until_ready(
        decoder_forward(x_repr, prep, window_size=window_size, in_size=in_size))

    ref = decoder_reference(x_repr, raw, window_size=window_size, in_size=in_size)
    assert out.shape == (batch, window_size, in_size)
    assert out_dec.shape == (batch, window_size, in_size)
    assert jnp.allclose(out_dec.astype(jnp.float32), ref, atol=3e-2, rtol=3e-2)
    assert jnp.allclose(out.astype(jnp.float32), ref, atol=3e-2, rtol=3e-2)

    # --- Case 2: larger out_dim exercising the layer-3 N-tiled path.
    batch2, window2, in2 = 8, 64, 8          # out_dim = 512
    x2 = jax.random.normal(k_x2, (batch2, window2, in2), jnp.float32)
    enc_w2 = 0.05 * jax.random.normal(k_enc2, (window2 * in2, repr_size),
                                      jnp.float32)
    raw2 = make_decoder_params(k_dec2, repr_size, in2, window2)
    prep2 = prepare_params(raw2, out_dim=in2 * window2, enc_w=enc_w2)

    out2 = jax.block_until_ready(
        masked_reconstruction_forward(x2, prep2, window_size=window2,
                                      in_size=in2, tn=256))
    x2_repr = x2.reshape(batch2, -1) @ enc_w2
    ref2 = decoder_reference(x2_repr, raw2, window_size=window2, in_size=in2)
    assert out2.shape == (batch2, window2, in2)
    assert jnp.allclose(out2.astype(jnp.float32), ref2, atol=3e-2, rtol=3e-2)

    print("KERNEL_OK")
</pallas_src>

<mosaic_0001>
module attributes {stable_mosaic.version = 11 : i64} {
  func.func @kernel(%arg0: i32, %arg1: memref<16x32xbf16, #tpu.memory_space<vmem>>, %arg2: memref<32x32xbf16, #tpu.memory_space<vmem>>, %arg3: memref<32x256xbf16, #tpu.memory_space<vmem>>, %arg4: memref<1x256xf32, #tpu.memory_space<vmem>>, %arg5: memref<256x128xbf16, #tpu.memory_space<vmem>>, %arg6: memref<1x128xf32, #tpu.memory_space<vmem>>, %arg7: memref<128x128xbf16, #tpu.memory_space<vmem>>, %arg8: memref<1x128xf32, #tpu.memory_space<vmem>>, %arg9: memref<1x128xf32, #tpu.memory_space<vmem>>, %arg10: memref<1x128xf32, #tpu.memory_space<vmem>>, %arg11: memref<16x32xbf16, #tpu.memory_space<vmem>>) attributes {dimension_semantics = [#tpu.dimension_semantics<parallel>], iteration_bounds = array<i64: 1>, scalar_prefetch = 0 : i64, scratch_operands = 0 : i64, tpu.core_type = #tpu.core_type<tc>, window_params = [{transform_indices = @transform_0, window_bounds = array<i64: 16, 32>}, {pipeline_mode = #tpu.pipeline_mode<synchronous>, transform_indices = @transform_1, window_bounds = array<i64: 32, 32>}, {pipeline_mode = #tpu.pipeline_mode<synchronous>, transform_indices = @transform_2, window_bounds = array<i64: 32, 256>}, {pipeline_mode = #tpu.pipeline_mode<synchronous>, transform_indices = @transform_3, window_bounds = array<i64: 1, 256>}, {pipeline_mode = #tpu.pipeline_mode<synchronous>, transform_indices = @transform_4, window_bounds = array<i64: 256, 128>}, {pipeline_mode = #tpu.pipeline_mode<synchronous>, transform_indices = @transform_5, window_bounds = array<i64: 1, 128>}, {pipeline_mode = #tpu.pipeline_mode<synchronous>, transform_indices = @transform_6, window_bounds = array<i64: 128, 128>}, {pipeline_mode = #tpu.pipeline_mode<synchronous>, transform_indices = @transform_7, window_bounds = array<i64: 1, 128>}, {pipeline_mode = #tpu.pipeline_mode<synchronous>, transform_indices = @transform_8, window_bounds = array<i64: 1, 128>}, {pipeline_mode = #tpu.pipeline_mode<synchronous>, transform_indices = @transform_9, window_bounds = array<i64: 1, 128>}, {transform_indices = @transform_10, window_bounds = array<i64: 16, 32>}]} {
    %c0 = arith.constant 0 : index
    %c0_0 = arith.constant 0 : index
    %0 = vector.load %arg1[%c0, %c0_0] : memref<16x32xbf16, #tpu.memory_space<vmem>>, vector<16x32xbf16>
    %c0_1 = arith.constant 0 : index
    %c0_2 = arith.constant 0 : index
    %1 = vector.load %arg2[%c0_1, %c0_2] : memref<32x32xbf16, #tpu.memory_space<vmem>>, vector<32x32xbf16>
    %cst = arith.constant dense<0.000000e+00> : vector<16x32xf32>
    %2 = tpu.matmul %0, %1, %cst {dimension_numbers = #tpu.dot_dimension_numbers<[1], [0], [0], [1], [0, 0, 1, 1], [], []>} : vector<16x32xbf16>, vector<32x32xbf16>, vector<16x32xf32> -> vector<16x32xf32>
    %3 = arith.truncf %2 : vector<16x32xf32> to vector<16x32xbf16>
    %c0_3 = arith.constant 0 : index
    %c0_4 = arith.constant 0 : index
    %4 = vector.load %arg3[%c0_3, %c0_4] : memref<32x256xbf16, #tpu.memory_space<vmem>>, vector<32x256xbf16>
    %cst_5 = arith.constant dense<0.000000e+00> : vector<16x256xf32>
    %5 = tpu.matmul %3, %4, %cst_5 {dimension_numbers = #tpu.dot_dimension_numbers<[1], [0], [0], [1], [0, 0, 1, 1], [], []>} : vector<16x32xbf16>, vector<32x256xbf16>, vector<16x256xf32> -> vector<16x256xf32>
    %c0_6 = arith.constant 0 : index
    %c0_7 = arith.constant 0 : index
    %6 = vector.load %arg4[%c0_6, %c0_7] : memref<1x256xf32, #tpu.memory_space<vmem>>, vector<1x256xf32>
    %7 = vector.broadcast %6 : vector<1x256xf32> to vector<16x256xf32>
    %8 = arith.addf %5, %7 : vector<16x256xf32>
    %cst_8 = arith.constant 0.000000e+00 : f32
    %9 = vector.broadcast %cst_8 : f32 to vector<16x256xf32>
    %10 = arith.maximumf %8, %9 : vector<16x256xf32>
    %11 = arith.truncf %10 : vector<16x256xf32> to vector<16x256xbf16>
    %c0_9 = arith.constant 0 : index
    %c0_10 = arith.constant 0 : index
    %12 = vector.load %arg5[%c0_9, %c0_10] : memref<256x128xbf16, #tpu.memory_space<vmem>>, vector<256x128xbf16>
    %cst_11 = arith.constant dense<0.000000e+00> : vector<16x128xf32>
    %13 = tpu.matmul %11, %12, %cst_11 {dimension_numbers = #tpu.dot_dimension_numbers<[1], [0], [0], [1], [0, 0, 1, 1], [], []>} : vector<16x256xbf16>, vector<256x128xbf16>, vector<16x128xf32> -> vector<16x128xf32>
    %c0_12 = arith.constant 0 : index
    %c0_13 = arith.constant 0 : index
    %14 = vector.load %arg6[%c0_12, %c0_13] : memref<1x128xf32, #tpu.memory_space<vmem>>, vector<1x128xf32>
    %15 = vector.broadcast %14 : vector<1x128xf32> to vector<16x128xf32>
    %16 = arith.addf %13, %15 : vector<16x128xf32>
    %cst_14 = arith.constant 0.000000e+00 : f32
    %17 = vector.broadcast %cst_14 : f32 to vector<16x128xf32>
    %18 = arith.maximumf %16, %17 : vector<16x128xf32>
    %19 = arith.truncf %18 : vector<16x128xf32> to vector<16x128xbf16>
    %c0_15 = arith.constant 0 : index
    %c0_16 = arith.constant 0 : index
    %20 = vector.load %arg7[%c0_15, %c0_16] : memref<128x128xbf16, #tpu.memory_space<vmem>>, vector<128x128xbf16>
    %cst_17 = arith.constant dense<0.000000e+00> : vector<16x128xf32>
    %21 = tpu.matmul %19, %20, %cst_17 {dimension_numbers = #tpu.dot_dimension_numbers<[1], [0], [0], [1], [0, 0, 1, 1], [], []>} : vector<16x128xbf16>, vector<128x128xbf16>, vector<16x128xf32> -> vector<16x128xf32>
    %c0_18 = arith.constant 0 : index
    %c0_19 = arith.constant 0 : index
    %22 = vector.load %arg8[%c0_18, %c0_19] : memref<1x128xf32, #tpu.memory_space<vmem>>, vector<1x128xf32>
    %23 = vector.broadcast %22 : vector<1x128xf32> to vector<16x128xf32>
    %24 = arith.addf %21, %23 : vector<16x128xf32>
    %cst_20 = arith.constant 0.000000e+00 : f32
    %25 = vector.broadcast %cst_20 : f32 to vector<16x128xf32>
    %26 = arith.maximumf %24, %25 : vector<16x128xf32>
    %c0_21 = arith.constant 0 : index
    %c0_22 = arith.constant 0 : index
    %27 = vector.load %arg9[%c0_21, %c0_22] : memref<1x128xf32, #tpu.memory_space<vmem>>, vector<1x128xf32>
    %28 = vector.broadcast %27 : vector<1x128xf32> to vector<16x128xf32>
    %29 = arith.mulf %26, %28 : vector<16x128xf32>
    %c0_23 = arith.constant 0 : index
    %c0_24 = arith.constant 0 : index
    %30 = vector.load %arg10[%c0_23, %c0_24] : memref<1x128xf32, #tpu.memory_space<vmem>>, vector<1x128xf32>
    %31 = vector.broadcast %30 : vector<1x128xf32> to vector<16x128xf32>
    %32 = arith.addf %29, %31 : vector<16x128xf32>
    %33 = vector.extract_strided_slice %32 {offsets = [0, 0], sizes = [16, 32], strides = [1, 1]} : vector<16x128xf32> to vector<16x32xf32>
    %34 = arith.truncf %33 : vector<16x32xf32> to vector<16x32xbf16>
    %c0_25 = arith.constant 0 : index
    %c0_26 = arith.constant 0 : index
    %35 = vector.load %arg11[%c0_25, %c0_26] : memref<16x32xbf16, #tpu.memory_space<vmem>>, vector<16x32xbf16>
    tpu.vector_store %arg11[%c0_25, %c0_26], %34 {strides = array<i32>} : memref<16x32xbf16, #tpu.memory_space<vmem>>, vector<16x32xbf16>,
    return
  }
  func.func @transform_0(%arg0: i32) -> (i32, i32) {
    %c0_i32 = arith.constant 0 : i32
    %c0_i32_0 = arith.constant 0 : i32
    return %arg0, %c0_i32 : i32, i32
  }
  func.func @transform_1(%arg0: i32) -> (i32, i32) {
    %c0_i32 = arith.constant 0 : i32
    %c0_i32_0 = arith.constant 0 : i32
    %c0_i32_1 = arith.constant 0 : i32
    return %c0_i32, %c0_i32_0 : i32, i32
  }
  func.func @transform_2(%arg0: i32) -> (i32, i32) {
    %c0_i32 = arith.constant 0 : i32
    %c0_i32_0 = arith.constant 0 : i32
    %c0_i32_1 = arith.constant 0 : i32
    return %c0_i32, %c0_i32_0 : i32, i32
  }
  func.func @transform_3(%arg0: i32) -> (i32, i32) {
    %c0_i32 = arith.constant 0 : i32
    %c0_i32_0 = arith.constant 0 : i32
    %c0_i32_1 = arith.constant 0 : i32
    return %c0_i32, %c0_i32_0 : i32, i32
  }
  func.func @transform_4(%arg0: i32) -> (i32, i32) {
    %c0_i32 = arith.constant 0 : i32
    %c0_i32_0 = arith.constant 0 : i32
    %c0_i32_1 = arith.constant 0 : i32
    return %c0_i32, %c0_i32_0 : i32, i32
  }
  func.func @transform_5(%arg0: i32) -> (i32, i32) {
    %c0_i32 = arith.constant 0 : i32
    %c0_i32_0 = arith.constant 0 : i32
    %c0_i32_1 = arith.constant 0 : i32
    return %c0_i32, %c0_i32_0 : i32, i32
  }
  func.func @transform_6(%arg0: i32) -> (i32, i32) {
    %c0_i32 = arith.constant 0 : i32
    %c0_i32_0 = arith.constant 0 : i32
    %c0_i32_1 = arith.constant 0 : i32
    return %c0_i32, %c0_i32_0 : i32, i32
  }
  func.func @transform_7(%arg0: i32) -> (i32, i32) {
    %c0_i32 = arith.constant 0 : i32
    %c0_i32_0 = arith.constant 0 : i32
    %c0_i32_1 = arith.constant 0 : i32
    return %c0_i32, %c0_i32_0 : i32, i32
  }
  func.func @transform_8(%arg0: i32) -> (i32, i32) {
    %c0_i32 = arith.constant 0 : i32
    %c0_i32_0 = arith.constant 0 : i32
    %c0_i32_1 = arith.constant 0 : i32
    return %c0_i32, %c0_i32_0 : i32, i32
  }
  func.func @transform_9(%arg0: i32) -> (i32, i32) {
    %c0_i32 = arith.constant 0 : i32
    %c0_i32_0 = arith.constant 0 : i32
    %c0_i32_1 = arith.constant 0 : i32
    return %c0_i32, %c0_i32_0 : i32, i32
  }
  func.func @transform_10(%arg0: i32) -> (i32, i32) {
    %c0_i32 = arith.constant 0 : i32
    %c0_i32_0 = arith.constant 0 : i32
    return %arg0, %c0_i32 : i32, i32
  }
}

</mosaic_0001>

<llo_original>
// kernel: tpu_custom_call.1
$region0: #{tpu_custom_call.1}
  #allocation0 [shape = 'u32[]', space=smem, size = 0x4, offset = 0x4, fixed_abs, tag = 'smem constant byte address 0x4 - core index']
  #allocation1 [shape = 'u32[144,128]{1,0:T(1,128)}', space=vmem, size = 0x12000, scoped, tag = 'internal scratch']
  %s0 = inlined_call_operand.hbm [shape: bf16[16,32], index: 0, kind: input, shape index: {}]
  %s1 = inlined_call_operand.hbm [shape: bf16[32,32], index: 1, kind: input, shape index: {}]
  %s2 = inlined_call_operand.hbm [shape: bf16[32,256], index: 2, kind: input, shape index: {}]
  %s3 = inlined_call_operand.vmem [shape: f32[1,256], index: 3, kind: input, shape index: {}]
  %s4 = inlined_call_operand.hbm [shape: bf16[256,128], index: 4, kind: input, shape index: {}]
  %s5 = inlined_call_operand.vmem [shape: f32[1,128], index: 5, kind: input, shape index: {}]
  %s6 = inlined_call_operand.hbm [shape: bf16[128,128], index: 6, kind: input, shape index: {}]
  %s7 = inlined_call_operand.vmem [shape: f32[1,128], index: 7, kind: input, shape index: {}]
  %s8 = inlined_call_operand.vmem [shape: f32[1,128], index: 8, kind: input, shape index: {}]
  %s9 = inlined_call_operand.vmem [shape: f32[1,128], index: 9, kind: input, shape index: {}]
  %s10 = inlined_call_operand.hbm [shape: bf16[16,32], index: 10, kind: output, shape index: {}]
  %s11 = sld [smem:[#allocation0]]
  $region70: #{tpu_custom_call.1} parent=0
    _
  %s13 = ssub.s32 1, %s11
  %s14 = scalar_select 0, %s13, %s11
  $region1: #{tpu_custom_call.1} parent=0
    #allocation2 [shape = 'u8[4096]{0}', space=vmem, size = 0x1000, scoped, tag = 'input window, operand 0, single buffered']
    #allocation3 [shape = 's32[1]{0}', space=sflag, size = 0x4, scoped, tag = 'scoped memory for tpu_custom_call.1']
    #allocation4 [shape = 's32[1]{0}', space=sflag, size = 0x4, scoped, tag = 'scoped memory for tpu_custom_call.1']
    #allocation5 [shape = 'u8[8192]{0}', space=vmem, size = 0x2000, scoped, tag = 'input window, operand 1, single buffered']
    #allocation6 [shape = 's32[1]{0}', space=sflag, size = 0x4, scoped, tag = 'scoped memory for tpu_custom_call.1']
    #allocation7 [shape = 'u8[16384]{0}', space=vmem, size = 0x4000, scoped, tag = 'input window, operand 2, single buffered']
    #allocation8 [shape = 'u8[65536]{0}', space=vmem, size = 0x10000, scoped, tag = 'input window, operand 4, single buffered']
    #allocation9 [shape = 's32[1]{0}', space=sflag, size = 0x4, scoped, tag = 'scoped memory for tpu_custom_call.1']
    #allocation10 [shape = 'u8[32768]{0}', space=vmem, size = 0x8000, scoped, tag = 'input window, operand 6, single buffered']
    #allocation11 [shape = 'u8[4096]{0}', space=vmem, size = 0x1000, scoped, tag = 'output window, operand 0, single buffered']
    %15 = vsyncpa [#allocation3], 0
    %16 = vsyncpa [#allocation6], 0
    %17 = vsyncpa [#allocation9], 0
    %18 = vsyncpa [#allocation4], 0
    // Predicated region
    $region2: #{tpu_custom_call.1} parent=1 // pred_check
      _
    $region3: #{tpu_custom_call.1} parent=1 // pred_check_branch
      %20 = sbr.rel (0) target = $region5
    $region4: #{tpu_custom_call.1} parent=1 // pred_region
      %s22 = ssub.s32 128, 128
      %23 = vsyncadd [#allocation3], %s22
      %s24 = sshll.u32 [#allocation2], 4
      %s25 = int_to_ptr.vmem [resolvable:$true] %s24
      %30 = dma.hbm_to_vmem [thread:$0]  %s0, 128, %s25, [#allocation3], 64, 64, 4
    $region5: #{tpu_custom_call.1} parent=1 // pred_fallthru
      _
    // Predicated region
    $region6: #{tpu_custom_call.1} parent=1 // pred_check
      _
    $region7: #{tpu_custom_call.1} parent=1 // pred_check_branch
      %32 = sbr.rel (0) target = $region9
    $region8: #{tpu_custom_call.1} parent=1 // pred_region
      %s34 = ssub.s32 256, 256
      %35 = vsyncadd [#allocation6], %s34
      %s36 = sshll.u32 [#allocation5], 4
      %s37 = int_to_ptr.vmem [resolvable:$true] %s36
      %42 = dma.hbm_to_vmem [thread:$0]  %s1, 256, %s37, [#allocation6], 64, 64, 4
    $region9: #{tpu_custom_call.1} parent=1 // pred_fallthru
      _
    // Predicated region
    $region10: #{tpu_custom_call.1} parent=1 // pred_check
      _
    $region11: #{tpu_custom_call.1} parent=1 // pred_check_branch
      %44 = sbr.rel (0) target = $region13
    $region12: #{tpu_custom_call.1} parent=1 // pred_region
      %s46 = ssub.s32 512, 512
      %47 = vsyncadd [#allocation6], %s46
      %s48 = sshll.u32 [#allocation7], 4
      %s49 = int_to_ptr.vmem [resolvable:$true] %s48
      %54 = dma.hbm_to_vmem [thread:$0]  %s2, 512, %s49, [#allocation6], 128, 128, 8
    $region13: #{tpu_custom_call.1} parent=1 // pred_fallthru
      _
    // Predicated region
    $region14: #{tpu_custom_call.1} parent=1 // pred_check
      _
    $region15: #{tpu_custom_call.1} parent=1 // pred_check_branch
      %56 = sbr.rel (0) target = $region17
    $region16: #{tpu_custom_call.1} parent=1 // pred_region
      _
    $region17: #{tpu_custom_call.1} parent=1 // pred_fallthru
      _
    // Predicated region
    $region18: #{tpu_custom_call.1} parent=1 // pred_check
      _
    $region19: #{tpu_custom_call.1} parent=1 // pred_check_branch
      %58 = sbr.rel (0) target = $region21
    $region20: #{tpu_custom_call.1} parent=1 // pred_region
      %s60 = ssub.s32 2048, 2048
      %61 = vsyncadd [#allocation9], %s60
      %s62 = sshll.u32 [#allocation8], 4
      %s63 = int_to_ptr.vmem [resolvable:$true] %s62
      %68 = dma.hbm_to_vmem [thread:$0]  %s4, 2048, %s63, [#allocation9], 64, 64, 4
    $region21: #{tpu_custom_call.1} parent=1 // pred_fallthru
      _
    // Predicated region
    $region22: #{tpu_custom_call.1} parent=1 // pred_check
      _
    $region23: #{tpu_custom_call.1} parent=1 // pred_check_branch
      %70 = sbr.rel (0) target = $region25
    $region24: #{tpu_custom_call.1} parent=1 // pred_region
      _
    $region25: #{tpu_custom_call.1} parent=1 // pred_fallthru
      _
    // Predicated region
    $region26: #{tpu_custom_call.1} parent=1 // pred_check
      _
    $region27: #{tpu_custom_call.1} parent=1 // pred_check_branch
      %72 = sbr.rel (0) target = $region29
    $region28: #{tpu_custom_call.1} parent=1 // pred_region
      %s74 = ssub.s32 1024, 1024
      %75 = vsyncadd [#allocation9], %s74
      %s76 = sshll.u32 [#allocation10], 4
      %s77 = int_to_ptr.vmem [resolvable:$true] %s76
      %82 = dma.hbm_to_vmem [thread:$0]  %s6, 1024, %s77, [#allocation9], 64, 64, 4
    $region29: #{tpu_custom_call.1} parent=1 // pred_fallthru
      _
    // Predicated region
    $region30: #{tpu_custom_call.1} parent=1 // pred_check
      _
    $region31: #{tpu_custom_call.1} parent=1 // pred_check_branch
      %84 = sbr.rel (0) target = $region33
    $region32: #{tpu_custom_call.1} parent=1 // pred_region
      _
    $region33: #{tpu_custom_call.1} parent=1 // pred_fallthru
      _
    // Predicated region
    $region34: #{tpu_custom_call.1} parent=1 // pred_check
      _
    $region35: #{tpu_custom_call.1} parent=1 // pred_check_branch
      %86 = sbr.rel (0) target = $region37
    $region36: #{tpu_custom_call.1} parent=1 // pred_region
      _
    $region37: #{tpu_custom_call.1} parent=1 // pred_fallthru
      _
    // Predicated region
    $region38: #{tpu_custom_call.1} parent=1 // pred_check
      _
    $region39: #{tpu_custom_call.1} parent=1 // pred_check_branch
      %88 = sbr.rel (0) target = $region41
    $region40: #{tpu_custom_call.1} parent=1 // pred_region
      _
    $region41: #{tpu_custom_call.1} parent=1 // pred_fallthru
      _
    // Predicated region
    $region42: #{tpu_custom_call.1} parent=1 // pred_check
      _
    $region43: #{tpu_custom_call.1} parent=1 // pred_check_branch
      %90 = sbr.rel (0) target = $region45
    $region44: #{tpu_custom_call.1} parent=1 // pred_region
      %91 = dma.done [#allocation3], 128
    $region45: #{tpu_custom_call.1} parent=1 // pred_fallthru
      _
    // Predicated region
    $region46: #{tpu_custom_call.1} parent=1 // pred_check
      _
    $region47: #{tpu_custom_call.1} parent=1 // pred_check_branch
      %93 = sbr.rel (0) target = $region49
    $region48: #{tpu_custom_call.1} parent=1 // pred_region
      %94 = dma.done [#allocation6], 256
    $region49: #{tpu_custom_call.1} parent=1 // pred_fallthru
      _
    // Predicated region
    $region50: #{tpu_custom_call.1} parent=1 // pred_check
      _
    $region51: #{tpu_custom_call.1} parent=1 // pred_check_branch
      %96 = sbr.rel (0) target = $region53
    $region52: #{tpu_custom_call.1} parent=1 // pred_region
      %97 = dma.done [#allocation6], 512
    $region53: #{tpu_custom_call.1} parent=1 // pred_fallthru
      _
    // Predicated region
    $region54: #{tpu_custom_call.1} parent=1 // pred_check
      _
    $region55: #{tpu_custom_call.1} parent=1 // pred_check_branch
      %99 = sbr.rel (0) target = $region57
    $region56: #{tpu_custom_call.1} parent=1 // pred_region
      %100 = dma.done [#allocation9], 2048
    $region57: #{tpu_custom_call.1} parent=1 // pred_fallthru
      _
    // Predicated region
    $region58: #{tpu_custom_call.1} parent=1 // pred_check
      _
    $region59: #{tpu_custom_call.1} parent=1 // pred_check_branch
      %102 = sbr.rel (0) target = $region61
    $region60: #{tpu_custom_call.1} parent=1 // pred_region
      %103 = dma.done [#allocation9], 1024
    $region61: #{tpu_custom_call.1} parent=1 // pred_fallthru
      _
    %v105 = vld [vmem:[#allocation2] sm:$0xf]
    %v106 = vld [vmem:[#allocation2 + $0x4] sm:$0xf]
    %v107 = vld [vmem:[#allocation5] sm:$0xf]
    %v108 = vld [vmem:[#allocation5 + $0x4] sm:$0xf]
    %v109 = vld [vmem:[#allocation5 + $0x8] sm:$0xf]
    %v110 = vld [vmem:[#allocation5 + $0xc] sm:$0xf]
    %v113 = vunpack.c.l.b16 %v105
    %v114 = vunpack.c.l.b16 %v106
    %v115 = vpack.c.b16 %v114, %v113
    %v120 = vunpack.c.l.b16 %v107
    %v121 = vunpack.c.l.b16 %v108
    %v122 = vunpack.c.l.b16 %v109
    %v123 = vunpack.c.l.b16 %v110
    %v124 = vpack.c.b16 %v121, %v120
    %v125 = vpack.c.b16 %v123, %v122
    %vm128 = vcmask 261120
    %v130 = vsel %vm128, %v115, 0
    %132 = vmatprep.subr.bf16.mxu0 0
    %133 = vmatpush1.bf16.msra.mxu0 %v124
    %134 = vmatprep.subr.bf16.mxu0 0
    %135 = vmatpush1.bf16.msra.mxu0 %v125
    %136 = vmatprep.subr.bf16.mxu0 0
    %137 = vmatpush1.bf16.msra.mxu0 0
    %138 = vmatprep.subr.bf16.mxu0 0
    %139 = vmatpush1.bf16.msra.mxu0 0
    %140 = vmatprep.subr.bf16.mxu0 0
    %141 = vmatpush1.bf16.msra.mxu0 0
    %142 = vmatprep.subr.bf16.mxu0 0
    %143 = vmatpush1.bf16.msra.mxu0 0
    %144 = vmatprep.subr.bf16.mxu0 0
    %145 = vmatpush1.bf16.msra.mxu0 0
    %146 = vmatprep.subr.bf16.mxu0 0
    %147 = vmatpush1.bf16.msra.mxu0 0
    %148 = vmatprep.subr.bf16.mxu0 0
    %149 = vmatpush1.bf16.msra.mxu0 0
    %150 = vmatprep.subr.bf16.mxu0 0
    %151 = vmatpush1.bf16.msra.mxu0 0
    %152 = vmatprep.subr.bf16.mxu0 0
    %153 = vmatpush1.bf16.msra.mxu0 0
    %154 = vmatprep.subr.bf16.mxu0 0
    %155 = vmatpush1.bf16.msra.mxu0 0
    %156 = vmatprep.subr.bf16.mxu0 0
    %157 = vmatpush1.bf16.msra.mxu0 0
    %158 = vmatprep.subr.bf16.mxu0 0
    %159 = vmatpush1.bf16.msra.mxu0 0
    %160 = vmatprep.subr.bf16.mxu0 0
    %161 = vmatpush1.bf16.msra.mxu0 0
    %162 = vmatprep.subr.bf16.mxu0 0
    %163 = vmatpush1.bf16.msra.mxu0 0
    %164 = vmatprep.mubr.bf16.mxu0 0
    %165 = vmatmul.mubr.bf16.gmra.mrb[0].mxu0 %v130
    %v166 = vpop.f32.mrb[0].mxu0
    %v167 = vadd.f32 0.0, %v166
    %v168 = vpop.f32.mrb[0].mxu0
    %v169 = vpop.f32.mrb[0].mxu0
    %v170 = vadd.f32 0.0, %v169
    %v171 = vpop.f32.mrb[0].mxu0
    %172 = vdwg.mxu0
    %v173 = vpack.c.bf16 %v170, %v167
    %v174 = vld [vmem:[#allocation7] sm:$0xff]
    %v175 = vld [vmem:[#allocation7 + $0x8] sm:$0xff]
    %v176 = vld [vmem:[#allocation7 + $0x10] sm:$0xff]
    %v177 = vld [vmem:[#allocation7 + $0x18] sm:$0xff]
    %v178 = vld [vmem:[%s3] sm:$0x3]
    %v180 = vlaneseq
    %v181 = vshrl.u32 %v180, 7
    %v182 = vsub.s32 0, %v181
    %v183 = vrot.slane %v178, %v182
    %v184 = vlaneseq
    %v185 = vshrl.u32 %v184, 7
    %v186 = vsub.s32 1, %v185
    %v187 = vrot.slane %v178, %v186
    %v194 = vunpack.c.l.b16 %v174
    %v195 = vunpack.c.h.b16 %v174
    %v196 = vunpack.c.l.b16 %v175
    %v197 = vunpack.c.h.b16 %v175
    %v198 = vunpack.c.l.b16 %v176
    %v199 = vunpack.c.h.b16 %v176
    %v200 = vunpack.c.l.b16 %v177
    %v201 = vunpack.c.h.b16 %v177
    %v202 = vpack.c.b16 %v196, %v194
    %v203 = vpack.c.b16 %v197, %v195
    %v204 = vpack.c.b16 %v200, %v198
    %v205 = vpack.c.b16 %v201, %v199
    %v211 = vsel %vm128, %v173, 0
    %213 = vmatprep.subr.bf16.mxu0 %v203
    %214 = vmatpush1.bf16.msra.mxu0 %v202
    %215 = vmatprep.subr.bf16.mxu0 %v205
    %216 = vmatpush1.bf16.msra.mxu0 %v204
    %217 = vmatprep.subr.bf16.mxu0 0
    %218 = vmatpush1.bf16.msra.mxu0 0
    %219 = vmatprep.subr.bf16.mxu0 0
    %220 = vmatpush1.bf16.msra.mxu0 0
    %221 = vmatprep.subr.bf16.mxu0 0
    %222 = vmatpush1.bf16.msra.mxu0 0
    %223 = vmatprep.subr.bf16.mxu0 0
    %224 = vmatpush1.bf16.msra.mxu0 0
    %225 = vmatprep.subr.bf16.mxu0 0
    %226 = vmatpush1.bf16.msra.mxu0 0
    %227 = vmatprep.subr.bf16.mxu0 0
    %228 = vmatpush1.bf16.msra.mxu0 0
    %229 = vmatprep.subr.bf16.mxu0 0
    %230 = vmatpush1.bf16.msra.mxu0 0
    %231 = vmatprep.subr.bf16.mxu0 0
    %232 = vmatpush1.bf16.msra.mxu0 0
    %233 = vmatprep.subr.bf16.mxu0 0
    %234 = vmatpush1.bf16.msra.mxu0 0
    %235 = vmatprep.subr.bf16.mxu0 0
    %236 = vmatpush1.bf16.msra.mxu0 0
    %237 = vmatprep.subr.bf16.mxu0 0
    %238 = vmatpush1.bf16.msra.mxu0 0
    %239 = vmatprep.subr.bf16.mxu0 0
    %240 = vmatpush1.bf16.msra.mxu0 0
    %241 = vmatprep.subr.bf16.mxu0 0
    %242 = vmatpush1.bf16.msra.mxu0 0
    %243 = vmatprep.subr.bf16.mxu0 0
    %244 = vmatpush1.bf16.msra.mxu0 0
    %245 = vmatprep.mubr.bf16.mxu0 0
    %246 = vmatmul.mubr.bf16.gmra.mrb[0].mxu0 %v211
    %v247 = vpop.f32.mrb[0].mxu0
    %v248 = vadd.f32 %v183, %v247
    %v249 = vpop.f32.mrb[0].mxu0
    %v250 = vadd.f32 %v187, %v249
    %v251 = vpop.f32.mrb[0].mxu0
    %v252 = vadd.f32 %v183, %v251
    %v253 = vpop.f32.mrb[0].mxu0
    %v254 = vadd.f32 %v187, %v253
    %255 = vdwg.mxu0
    %v256 = vmax.f32 %v248, 0.0
    %v257 = vmax.f32 %v250, 0.0
    %v258 = vmax.f32 %v252, 0.0
    %v259 = vmax.f32 %v254, 0.0
    %v260 = vpack.c.bf16 %v258, %v256
    %v261 = vpack.c.bf16 %v259, %v257
    %v262 = vld [vmem:[#allocation8] sm:$0xf]
    %v263 = vld [vmem:[#allocation8 + $0x4] sm:$0xf]
    %v264 = vld [vmem:[#allocation8 + $0x8] sm:$0xf]
    %v265 = vld [vmem:[#allocation8 + $0xc] sm:$0xf]
    %v266 = vld [vmem:[#allocation8 + $0x10] sm:$0xf]
    %v267 = vld [vmem:[#allocation8 + $0x14] sm:$0xf]
    %v268 = vld [vmem:[#allocation8 + $0x18] sm:$0xf]
    %v269 = vld [vmem:[#allocation8 + $0x1c] sm:$0xf]
    %v270 = vld [vmem:[#allocation8 + $0x20] sm:$0xf]
    %v271 = vld [vmem:[#allocation8 + $0x24] sm:$0xf]
    %v272 = vld [vmem:[#allocation8 + $0x28] sm:$0xf]
    %v273 = vld [vmem:[#allocation8 + $0x2c] sm:$0xf]
    %v274 = vld [vmem:[#allocation8 + $0x30] sm:$0xf]
    %v275 = vld [vmem:[#allocation8 + $0x34] sm:$0xf]
    %v276 = vld [vmem:[#allocation8 + $0x38] sm:$0xf]
    %v277 = vld [vmem:[#allocation8 + $0x3c] sm:$0xf]
    %v278 = vld [vmem:[#allocation8 + $0x40] sm:$0xf]
    %v279 = vld [vmem:[#allocation8 + $0x44] sm:$0xf]
    %v280 = vld [vmem:[#allocation8 + $0x48] sm:$0xf]
    %v281 = vld [vmem:[#allocation8 + $0x4c] sm:$0xf]
    %v282 = vld [vmem:[#allocation8 + $0x50] sm:$0xf]
    %v283 = vld [vmem:[#allocation8 + $0x54] sm:$0xf]
    %v284 = vld [vmem:[#allocation8 + $0x58] sm:$0xf]
    %v285 = vld [vmem:[#allocation8 + $0x5c] sm:$0xf]
    %v286 = vld [vmem:[#allocation8 + $0x60] sm:$0xf]
    %v287 = vld [vmem:[#allocation8 + $0x64] sm:$0xf]
    %v288 = vld [vmem:[#allocation8 + $0x68] sm:$0xf]
    %v289 = vld [vmem:[#allocation8 + $0x6c] sm:$0xf]
    %v290 = vld [vmem:[#allocation8 + $0x70] sm:$0xf]
    %v291 = vld [vmem:[#allocation8 + $0x74] sm:$0xf]
    %v292 = vld [vmem:[#allocation8 + $0x78] sm:$0xf]
    %v293 = vld [vmem:[#allocation8 + $0x7c] sm:$0xf]
    %v294 = vld [vmem:[%s5] sm:$0x1]
    %v296 = vlaneseq
    %v297 = vshrl.u32 %v296, 7
    %v298 = vsub.s32 0, %v297
    %v299 = vrot.slane %v294, %v298
    %v333 = vunpack.c.l.b16 %v262
    %v334 = vunpack.c.l.b16 %v263
    %v335 = vunpack.c.l.b16 %v264
    %v336 = vunpack.c.l.b16 %v265
    %v337 = vunpack.c.l.b16 %v266
    %v338 = vunpack.c.l.b16 %v267
    %v339 = vunpack.c.l.b16 %v268
    %v340 = vunpack.c.l.b16 %v269
    %v341 = vunpack.c.l.b16 %v270
    %v342 = vunpack.c.l.b16 %v271
    %v343 = vunpack.c.l.b16 %v272
    %v344 = vunpack.c.l.b16 %v273
    %v345 = vunpack.c.l.b16 %v274
    %v346 = vunpack.c.l.b16 %v275
    %v347 = vunpack.c.l.b16 %v276
    %v348 = vunpack.c.l.b16 %v277
    %v349 = vunpack.c.l.b16 %v278
    %v350 = vunpack.c.l.b16 %v279
    %v351 = vunpack.c.l.b16 %v280
    %v352 = vunpack.c.l.b16 %v281
    %v353 = vunpack.c.l.b16 %v282
    %v354 = vunpack.c.l.b16 %v283
    %v355 = vunpack.c.l.b16 %v284
    %v356 = vunpack.c.l.b16 %v285
    %v357 = vunpack.c.l.b16 %v286
    %v358 = vunpack.c.l.b16 %v287
    %v359 = vunpack.c.l.b16 %v288
    %v360 = vunpack.c.l.b16 %v289
    %v361 = vunpack.c.l.b16 %v290
    %v362 = vunpack.c.l.b16 %v291
    %v363 = vunpack.c.l.b16 %v292
    %v364 = vunpack.c.l.b16 %v293
    %v365 = vpack.c.b16 %v334, %v333
    %v366 = vpack.c.b16 %v336, %v335
    %v367 = vpack.c.b16 %v338, %v337
    %v368 = vpack.c.b16 %v340, %v339
    %v369 = vpack.c.b16 %v342, %v341
    %v370 = vpack.c.b16 %v344, %v343
    %v371 = vpack.c.b16 %v346, %v345
    %v372 = vpack.c.b16 %v348, %v347
    %v373 = vpack.c.b16 %v350, %v349
    %v374 = vpack.c.b16 %v352, %v351
    %v375 = vpack.c.b16 %v354, %v353
    %v376 = vpack.c.b16 %v356, %v355
    %v377 = vpack.c.b16 %v358, %v357
    %v378 = vpack.c.b16 %v360, %v359
    %v379 = vpack.c.b16 %v362, %v361
    %v380 = vpack.c.b16 %v364, %v363
    %397 = vmatprep.subr.bf16.mxu0 0
    %398 = vmatpush1.bf16.msra.mxu0 %v365
    %399 = vmatprep.subr.bf16.mxu0 0
    %400 = vmatpush1.bf16.msra.mxu0 %v366
    %401 = vmatprep.subr.bf16.mxu0 0
    %402 = vmatpush1.bf16.msra.mxu0 %v367
    %403 = vmatprep.subr.bf16.mxu0 0
    %404 = vmatpush1.bf16.msra.mxu0 %v368
    %405 = vmatprep.subr.bf16.mxu0 0
    %406 = vmatpush1.bf16.msra.mxu0 %v369
    %407 = vmatprep.subr.bf16.mxu0 0
    %408 = vmatpush1.bf16.msra.mxu0 %v370
    %409 = vmatprep.subr.bf16.mxu0 0
    %410 = vmatpush1.bf16.msra.mxu0 %v371
    %411 = vmatprep.subr.bf16.mxu0 0
    %412 = vmatpush1.bf16.msra.mxu0 %v372
    %413 = vmatprep.subr.bf16.mxu0 0
    %414 = vmatpush1.bf16.msra.mxu0 %v373
    %415 = vmatprep.subr.bf16.mxu0 0
    %416 = vmatpush1.bf16.msra.mxu0 %v374
    %417 = vmatprep.subr.bf16.mxu0 0
    %418 = vmatpush1.bf16.msra.mxu0 %v375
    %419 = vmatprep.subr.bf16.mxu0 0
    %420 = vmatpush1.bf16.msra.mxu0 %v376
    %421 = vmatprep.subr.bf16.mxu0 0
    %422 = vmatpush1.bf16.msra.mxu0 %v377
    %423 = vmatprep.subr.bf16.mxu0 0
    %424 = vmatpush1.bf16.msra.mxu0 %v378
    %425 = vmatprep.subr.bf16.mxu0 0
    %426 = vmatpush1.bf16.msra.mxu0 %v379
    %427 = vmatprep.subr.bf16.mxu0 0
    %428 = vmatpush1.bf16.msra.mxu0 %v380
    %429 = vmatprep.mubr.bf16.mxu0 %v261
    %430 = vmatmul.mubr.bf16.gmra.mrb[0].mxu0 %v260
    %v431 = vpop.f32.mrb[0].mxu0
    %v432 = vadd.f32 %v299, %v431
    %v433 = vpop.f32.mrb[0].mxu0
    %v434 = vpop.f32.mrb[0].mxu0
    %v435 = vadd.f32 %v299, %v434
    %v436 = vpop.f32.mrb[0].mxu0
    %437 = vdwg.mxu0
    %v438 = vmax.f32 %v432, 0.0
    %v439 = vmax.f32 %v435, 0.0
    %v440 = vpack.c.bf16 %v439, %v438
    %v441 = vld [vmem:[#allocation10] sm:$0xf]
    %v442 = vld [vmem:[#allocation10 + $0x4] sm:$0xf]
    %v443 = vld [vmem:[#allocation10 + $0x8] sm:$0xf]
    %v444 = vld [vmem:[#allocation10 + $0xc] sm:$0xf]
    %v445 = vld [vmem:[#allocation10 + $0x10] sm:$0xf]
    %v446 = vld [vmem:[#allocation10 + $0x14] sm:$0xf]
    %v447 = vld [vmem:[#allocation10 + $0x18] sm:$0xf]
    %v448 = vld [vmem:[#allocation10 + $0x1c] sm:$0xf]
    %v449 = vld [vmem:[#allocation10 + $0x20] sm:$0xf]
    %v450 = vld [vmem:[#allocation10 + $0x24] sm:$0xf]
    %v451 = vld [vmem:[#allocation10 + $0x28] sm:$0xf]
    %v452 = vld [vmem:[#allocation10 + $0x2c] sm:$0xf]
    %v453 = vld [vmem:[#allocation10 + $0x30] sm:$0xf]
    %v454 = vld [vmem:[#allocation10 + $0x34] sm:$0xf]
    %v455 = vld [vmem:[#allocation10 + $0x38] sm:$0xf]
    %v456 = vld [vmem:[#allocation10 + $0x3c] sm:$0xf]
    %v457 = vld [vmem:[%s7] sm:$0x1]
    %v459 = vlaneseq
    %v460 = vshrl.u32 %v459, 7
    %v461 = vsub.s32 0, %v460
    %v462 = vrot.slane %v457, %v461
    %v480 = vunpack.c.l.b16 %v441
    %v481 = vunpack.c.l.b16 %v442
    %v482 = vunpack.c.l.b16 %v443
    %v483 = vunpack.c.l.b16 %v444
    %v484 = vunpack.c.l.b16 %v445
    %v485 = vunpack.c.l.b16 %v446
    %v486 = vunpack.c.l.b16 %v447
    %v487 = vunpack.c.l.b16 %v448
    %v488 = vunpack.c.l.b16 %v449
    %v489 = vunpack.c.l.b16 %v450
    %v490 = vunpack.c.l.b16 %v451
    %v491 = vunpack.c.l.b16 %v452
    %v492 = vunpack.c.l.b16 %v453
    %v493 = vunpack.c.l.b16 %v454
    %v494 = vunpack.c.l.b16 %v455
    %v495 = vunpack.c.l.b16 %v456
    %v496 = vpack.c.b16 %v481, %v480
    %v497 = vpack.c.b16 %v483, %v482
    %v498 = vpack.c.b16 %v485, %v484
    %v499 = vpack.c.b16 %v487, %v486
    %v500 = vpack.c.b16 %v489, %v488
    %v501 = vpack.c.b16 %v491, %v490
    %v502 = vpack.c.b16 %v493, %v492
    %v503 = vpack.c.b16 %v495, %v494
    %512 = vmatprep.subr.bf16.mxu0 0
    %513 = vmatpush1.bf16.msra.mxu0 %v496
    %514 = vmatprep.subr.bf16.mxu0 0
    %515 = vmatpush1.bf16.msra.mxu0 %v497
    %516 = vmatprep.subr.bf16.mxu0 0
    %517 = vmatpush1.bf16.msra.mxu0 %v498
    %518 = vmatprep.subr.bf16.mxu0 0
    %519 = vmatpush1.bf16.msra.mxu0 %v499
    %520 = vmatprep.subr.bf16.mxu0 0
    %521 = vmatpush1.bf16.msra.mxu0 %v500
    %522 = vmatprep.subr.bf16.mxu0 0
    %523 = vmatpush1.bf16.msra.mxu0 %v501
    %524 = vmatprep.subr.bf16.mxu0 0
    %525 = vmatpush1.bf16.msra.mxu0 %v502
    %526 = vmatprep.subr.bf16.mxu0 0
    %527 = vmatpush1.bf16.msra.mxu0 %v503
    %528 = vmatprep.subr.bf16.mxu0 0
    %529 = vmatpush1.bf16.msra.mxu0 0
    %530 = vmatprep.subr.bf16.mxu0 0
    %531 = vmatpush1.bf16.msra.mxu0 0
    %532 = vmatprep.subr.bf16.mxu0 0
    %533 = vmatpush1.bf16.msra.mxu0 0
    %534 = vmatprep.subr.bf16.mxu0 0
    %535 = vmatpush1.bf16.msra.mxu0 0
    %536 = vmatprep.subr.bf16.mxu0 0
    %537 = vmatpush1.bf16.msra.mxu0 0
    %538 = vmatprep.subr.bf16.mxu0 0
    %539 = vmatpush1.bf16.msra.mxu0 0
    %540 = vmatprep.subr.bf16.mxu0 0
    %541 = vmatpush1.bf16.msra.mxu0 0
    %542 = vmatprep.subr.bf16.mxu0 0
    %543 = vmatpush1.bf16.msra.mxu0 0
    %544 = vmatprep.mubr.bf16.mxu0 0
    %545 = vmatmul.mubr.bf16.gmra.mrb[0].mxu0 %v440
    %v546 = vpop.f32.mrb[0].mxu0
    %v547 = vadd.f32 %v462, %v546
    %v548 = vpop.f32.mrb[0].mxu0
    %v549 = vpop.f32.mrb[0].mxu0
    %v550 = vadd.f32 %v462, %v549
    %v551 = vpop.f32.mrb[0].mxu0
    %552 = vdwg.mxu0
    %v553 = vmax.f32 %v547, 0.0
    %v554 = vmax.f32 %v550, 0.0
    %v555 = vld [vmem:[%s8] sm:$0x1]
    %v557 = vlaneseq
    %v558 = vshrl.u32 %v557, 7
    %v559 = vsub.s32 0, %v558
    %v560 = vrot.slane %v555, %v559
    %v562 = vmul.f32 %v553, %v560
    %v563 = vmul.f32 %v554, %v560
    %v564 = vld [vmem:[%s9] sm:$0x1]
    %v566 = vlaneseq
    %v567 = vshrl.u32 %v566, 7
    %v568 = vsub.s32 0, %v567
    %v569 = vrot.slane %v564, %v568
    %v571 = vadd.f32 %v562, %v569
    %v572 = vadd.f32 %v563, %v569
    %v573 = vpack.c.bf16 %v572, %v571
    %v575 = vunpack.c.l.b16 %v573
    %v576 = vunpack.c.h.b16 %v573
    %v577 = vpack.c.b16 %v575, %v575
    %v578 = vpack.c.b16 %v576, %v576
    %vm581 = vcmask 257024
    %582 = vst.msk [vmem:[#allocation11] sm:$0xf] %vm581, %v577
    %583 = vst.msk [vmem:[#allocation11 + $0x4] sm:$0xf] %vm581, %v578
    // Predicated region
    $region62: #{tpu_custom_call.1} parent=1 // pred_check
      _
    $region63: #{tpu_custom_call.1} parent=1 // pred_check_branch
      %585 = sbr.rel (0) target = $region65
    $region64: #{tpu_custom_call.1} parent=1 // pred_region
      %s587 = ssub.s32 128, 128
      %588 = vsyncadd [#allocation4], %s587
      %s589 = sshll.u32 [#allocation11], 4
      %s590 = int_to_ptr.vmem [resolvable:$true] %s589
      %595 = dma.vmem_to_hbm [thread:$0]  %s590, 128, %s10, [#allocation4], 64, 64, 4
    $region65: #{tpu_custom_call.1} parent=1 // pred_fallthru
      _
    // Predicated region
    $region66: #{tpu_custom_call.1} parent=1 // pred_check
      _
    $region67: #{tpu_custom_call.1} parent=1 // pred_check_branch
      %597 = sbr.rel (0) target = $region69
    $region68: #{tpu_custom_call.1} parent=1 // pred_region
      %598 = dma.done [#allocation4], 128
    $region69: #{tpu_custom_call.1} parent=1 // pred_fallthru
      _
    %599 = vsyncpa [#allocation3], 1
    %600 = vsyncpa [#allocation6], 1
    %601 = vsyncpa [#allocation9], 1
    %602 = vsyncpa [#allocation4], 1

</llo_original>
